<compile_context>
chip_gen: v5e
topology: v5e:2x2
jax: 0.10.0
libtpu: 0.0.40
codegen_flags: <defaults>
</compile_context>

<pallas_src>
import jax
import jax.numpy as jnp
from jax.experimental import pallas as pl
from jax.experimental.pallas import tpu as pltpu

_LANE = 128  # TPU vreg lane width; M tiles are multiples of this (lane-dense stores).


def _nconv_matmul_kernel(a_ref, x_ref, o_ref):
    # a_ref: (V, W)      adjacency, VMEM-resident across the whole grid
    # x_ref: (W, TM)     one lane-dense tile of the flattened (W, N*C*L) activations
    # o_ref: (V, TM)     lane-dense output tile
    o_ref[...] = jnp.dot(
        a_ref[...], x_ref[...], preferred_element_type=jnp.float32
    ).astype(o_ref.dtype)


def _vmem_capacity_bytes() -> int:
    """Per-core VMEM capacity, with a conservative fallback (v7x per-TC)."""
    try:
        info = pltpu.get_tpu_info()
        cap = int(getattr(info, "vmem_capacity_bytes", 0))
        if cap > 0:
            return cap
    except Exception:
        pass
    return 64 * 1024 * 1024


def nconv_vm(x_vm, A, *, compute_dtype=None, out_dtype=None, max_tile_m=16384):
    """Layout-persistent nconv:  y_vm(V, M) = A(V, W) @ x_vm(W, M).

    Zero layout passes.  Keep activations in this (node-major, lane-dense) layout
    across consecutive layers and the permutes in `nconv` disappear entirely.
    """
    W, M = x_vm.shape
    V, W2 = A.shape
    assert W == W2, "A second dim must match x's node (w) dim"

    out_dtype = jnp.dtype(x_vm.dtype) if out_dtype is None else jnp.dtype(out_dtype)
    if compute_dtype is not None:
        # Bandwidth-saving read path for this memory-bound matmul; MXU still
        # accumulates in f32.  NOTE: this intentionally downcasts A as well.
        x_vm = x_vm.astype(compute_dtype)
        A = A.astype(compute_dtype)
    elif A.dtype != x_vm.dtype:
        A = A.astype(x_vm.dtype)

    in_item = jnp.dtype(x_vm.dtype).itemsize
    out_item = jnp.dtype(out_dtype).itemsize

    # ---- VMEM-driven, megacore-aware M tiling -------------------------------
    vmem_budget = min(int(0.75 * _vmem_capacity_bytes()), 100 * 1024 * 1024)
    a_bytes = 2 * V * W * in_item                  # A buffers (constant index_map)
    slack = 2 * 1024 * 1024                        # Mosaic internal scratch headroom
    per_col = 2 * (W * in_item + V * out_item)     # double-buffered x + out columns
    max_tile_by_vmem = (vmem_budget - a_bytes - slack) // max(1, per_col)
    max_tile_by_vmem = max(_LANE, (max_tile_by_vmem // _LANE) * _LANE)

    max_tile_m = max(_LANE, (int(max_tile_m) // _LANE) * _LANE)
    tile_cap = min(max_tile_m, max_tile_by_vmem)

    m_lane = pl.cdiv(M, _LANE) * _LANE
    grid_m = pl.cdiv(m_lane, tile_cap)
    # Feed both TensorCores on v7x: at least 2 grid steps (when there is enough
    # data) and an even count so the "parallel" axis shards evenly across 2 TCs.
    if m_lane >= 2 * _LANE:
        grid_m = max(grid_m, 2)
        if grid_m % 2:
            grid_m += 1
    tile_m = pl.cdiv(pl.cdiv(m_lane, grid_m), _LANE) * _LANE
    m_pad = grid_m * tile_m

    if m_pad != M:
        # Zero columns contribute zeros to the output and are sliced off below.
        x_vm = jnp.pad(x_vm, ((0, 0), (0, m_pad - M)))

    # Actual per-call VMEM need (dtype-correct for mixed in/out precisions).
    vmem_bytes = 2 * W * tile_m * in_item + 2 * V * tile_m * out_item + a_bytes
    vmem_limit = int(min(vmem_budget, max(vmem_bytes + (8 << 20), 16 << 20)))

    cost = pl.CostEstimate(
        flops=int(2 * V * W * M),
        transcendentals=0,
        bytes_accessed=int(W * M * in_item + V * W * in_item + V * M * out_item),
    )

    y = pl.pallas_call(
        _nconv_matmul_kernel,
        out_shape=jax.ShapeDtypeStruct((V, m_pad), out_dtype),
        grid_spec=pltpu.PrefetchScalarGridSpec(
            num_scalar_prefetch=0,
            grid=(grid_m,),
            in_specs=[
                # A: full-array block, constant index_map -> stays in VMEM.
                pl.BlockSpec((V, W), lambda i: (0, 0)),
                # x: lane-dense (W, tile_m) slabs marching along M.
                pl.BlockSpec((W, tile_m), lambda i: (0, i)),
            ],
            out_specs=pl.BlockSpec((V, tile_m), lambda i: (0, i)),
        ),
        compiler_params=pltpu.CompilerParams(
            dimension_semantics=("parallel",),       # megacore-shardable on v7x
            vmem_limit_bytes=vmem_limit,
            # Let XLA fuse the producing transpose / pad / convert into the
            # operand read instead of a separate materialisation pass.
            allow_input_fusion=[True, True],
        ),
        cost_estimate=cost,
    )(A, x_vm)

    return y[:, :M] if m_pad != M else y


def nconv(x, A, *, compute_dtype=None, out_dtype=None, max_tile_m=16384):
    """out[n,c,v,l] = sum_w x[n,c,w,l] * A[v,w]   (== torch.einsum('ncwl,vw->ncvl'))."""
    N, C, W, L = x.shape
    V = A.shape[0]
    M = N * C * L

    # TODO(synk): in a multi-layer model, keep activations in the (W, M) layout and
    # call nconv_vm directly so these two permutes amortise to zero across layers.
    x_vm = jnp.transpose(x, (2, 0, 1, 3)).reshape(W, M)
    y_vm = nconv_vm(
        x_vm, A,
        compute_dtype=compute_dtype, out_dtype=out_dtype, max_tile_m=max_tile_m,
    )
    out = y_vm.reshape(V, N, C, L)
    return jnp.transpose(out, (1, 2, 0, 3))


if __name__ == "__main__":
    key = jax.random.PRNGKey(0)
    kx, ka, kx2 = jax.random.split(key, 3)

    # Small shapes consistent with the module: batch=2, channels=4, nodes=16, seq=8.
    N, C, W, L, V = 2, 4, 16, 8, 16
    x = jax.random.normal(kx, (N, C, W, L), dtype=jnp.float32)
    A = jax.random.normal(ka, (V, W), dtype=jnp.float32)

    out = jax.block_until_ready(nconv(x, A))
    ref = jnp.einsum("ncwl,vw->ncvl", x, A)
    assert out.shape == ref.shape, (out.shape, ref.shape)
    assert jnp.allclose(out, ref, atol=1e-4, rtol=1e-4), "mismatch vs einsum reference"

    # Second case: exercises the multi-tile (grid >= 2, megacore) + padding path.
    L2 = 48
    x_b = jax.random.normal(kx2, (N, C, W, L2), dtype=jnp.float32)
    out_b = jax.block_until_ready(nconv(x_b, A))
    ref_b = jnp.einsum("ncwl,vw->ncvl", x_b, A)
    assert out_b.shape == ref_b.shape, (out_b.shape, ref_b.shape)
    assert jnp.allclose(out_b, ref_b, atol=1e-4, rtol=1e-4), "mismatch (multi-tile)"

    print("KERNEL_OK")
</pallas_src>

<mosaic_0001>
module attributes {stable_mosaic.version = 11 : i64} {
  func.func @_nconv_matmul_kernel(%arg0: i32, %arg1: memref<16x16xf32, #tpu.memory_space<vmem>>, %arg2: memref<16x128xf32, #tpu.memory_space<vmem>>, %arg3: memref<16x128xf32, #tpu.memory_space<vmem>>) attributes {dimension_semantics = [#tpu.dimension_semantics<parallel>], iteration_bounds = array<i64: 1>, scalar_prefetch = 0 : i64, scratch_operands = 0 : i64, tpu.core_type = #tpu.core_type<tc>, window_params = [{pipeline_mode = #tpu.pipeline_mode<synchronous>, transform_indices = @transform_0, window_bounds = array<i64: 16, 16>}, {transform_indices = @transform_1, window_bounds = array<i64: 16, 128>}, {transform_indices = @transform_2, window_bounds = array<i64: 16, 128>}]} {
    %c0 = arith.constant 0 : index
    %c0_0 = arith.constant 0 : index
    %0 = vector.load %arg1[%c0, %c0_0] : memref<16x16xf32, #tpu.memory_space<vmem>>, vector<16x16xf32>
    %c0_1 = arith.constant 0 : index
    %c0_2 = arith.constant 0 : index
    %1 = vector.load %arg2[%c0_1, %c0_2] : memref<16x128xf32, #tpu.memory_space<vmem>>, vector<16x128xf32>
    %cst = arith.constant dense<0.000000e+00> : vector<16x128xf32>
    %2 = tpu.matmul %0, %1, %cst {dimension_numbers = #tpu.dot_dimension_numbers<[1], [0], [0], [1], [0, 0, 1, 1], [], []>} : vector<16x16xf32>, vector<16x128xf32>, vector<16x128xf32> -> vector<16x128xf32>
    %c0_3 = arith.constant 0 : index
    %c0_4 = arith.constant 0 : index
    %3 = vector.load %arg3[%c0_3, %c0_4] : memref<16x128xf32, #tpu.memory_space<vmem>>, vector<16x128xf32>
    tpu.vector_store %arg3[%c0_3, %c0_4], %2 {strides = array<i32>} : memref<16x128xf32, #tpu.memory_space<vmem>>, vector<16x128xf32>,
    return
  }
  func.func @transform_0(%arg0: i32) -> (i32, i32) {
    %c0_i32 = arith.constant 0 : i32
    %c0_i32_0 = arith.constant 0 : i32
    %c0_i32_1 = arith.constant 0 : i32
    return %c0_i32, %c0_i32_0 : i32, i32
  }
  func.func @transform_1(%arg0: i32) -> (i32, i32) {
    %c0_i32 = arith.constant 0 : i32
    %c0_i32_0 = arith.constant 0 : i32
    return %c0_i32, %arg0 : i32, i32
  }
  func.func @transform_2(%arg0: i32) -> (i32, i32) {
    %c0_i32 = arith.constant 0 : i32
    %c0_i32_0 = arith.constant 0 : i32
    return %c0_i32, %arg0 : i32, i32
  }
}

</mosaic_0001>

<llo_original>
// kernel: tpu_custom_call.1
$region0: #{tpu_custom_call.1}
  #allocation0 [shape = 'u32[]', space=smem, size = 0x4, offset = 0x4, fixed_abs, tag = 'smem constant byte address 0x4 - core index']
  #allocation1 [shape = 'u32[72,128]{1,0:T(1,128)}', space=vmem, size = 0x9000, scoped, tag = 'internal scratch']
  %s0 = inlined_call_operand.hbm [shape: f32[16,16], index: 0, kind: input, shape index: {}]
  %s1 = inlined_call_operand.hbm [shape: f32[16,128], index: 1, kind: input, shape index: {}]
  %s2 = inlined_call_operand.hbm [shape: f32[16,128], index: 2, kind: output, shape index: {}]
  %s3 = sld [smem:[#allocation0]]
  $region26: #{tpu_custom_call.1} parent=0
    _
  %s5 = ssub.s32 1, %s3
  %s6 = scalar_select 0, %s5, %s3
  $region1: #{tpu_custom_call.1} parent=0
    #allocation2 [shape = 'u8[8192]{0}', space=vmem, size = 0x2000, scoped, tag = 'input window, operand 0, single buffered']
    #allocation3 [shape = 's32[1]{0}', space=sflag, size = 0x4, scoped, tag = 'scoped memory for tpu_custom_call.1']
    #allocation4 [shape = 's32[1]{0}', space=sflag, size = 0x4, scoped, tag = 'scoped memory for tpu_custom_call.1']
    #allocation5 [shape = 'u8[8192]{0}', space=vmem, size = 0x2000, scoped, tag = 'input window, operand 1, single buffered']
    #allocation6 [shape = 's32[1]{0}', space=sflag, size = 0x4, scoped, tag = 'scoped memory for tpu_custom_call.1']
    #allocation7 [shape = 'u8[8192]{0}', space=vmem, size = 0x2000, scoped, tag = 'output window, operand 0, single buffered']
    %7 = vsyncpa [#allocation3], 0
    %8 = vsyncpa [#allocation6], 0
    %9 = vsyncpa [#allocation4], 0
    // Predicated region
    $region2: #{tpu_custom_call.1} parent=1 // pred_check
      _
    $region3: #{tpu_custom_call.1} parent=1 // pred_check_branch
      %11 = sbr.rel (0) target = $region5
    $region4: #{tpu_custom_call.1} parent=1 // pred_region
      %13 = vsyncadd [#allocation3], 0
      %s14 = sshll.u32 %s0, 4
      %s15 = int_to_ptr.hbm [resolvable:$true] %s14
      %s16 = sshll.u32 [#allocation2], 4
      %s17 = int_to_ptr.vmem [resolvable:$true] %s16
      %22 = dma.hbm_to_vmem [thread:$0]  %s15, 256, %s17, [#allocation3], 128, 128, 8
    $region5: #{tpu_custom_call.1} parent=1 // pred_fallthru
      _
    // Predicated region
    $region6: #{tpu_custom_call.1} parent=1 // pred_check
      _
    $region7: #{tpu_custom_call.1} parent=1 // pred_check_branch
      %24 = sbr.rel (0) target = $region9
    $region8: #{tpu_custom_call.1} parent=1 // pred_region
      %26 = vsyncadd [#allocation6], 0
      %s27 = sshll.u32 %s1, 4
      %s28 = int_to_ptr.hbm [resolvable:$true] %s27
      %s29 = sshll.u32 [#allocation5], 4
      %s30 = int_to_ptr.vmem [resolvable:$true] %s29
      %35 = dma.hbm_to_vmem [thread:$0]  %s28, 256, %s30, [#allocation6], 128, 128, 8
    $region9: #{tpu_custom_call.1} parent=1 // pred_fallthru
      _
    // Predicated region
    $region10: #{tpu_custom_call.1} parent=1 // pred_check
      _
    $region11: #{tpu_custom_call.1} parent=1 // pred_check_branch
      %37 = sbr.rel (0) target = $region13
    $region12: #{tpu_custom_call.1} parent=1 // pred_region
      %39 = dma.done [#allocation3], 256
    $region13: #{tpu_custom_call.1} parent=1 // pred_fallthru
      _
    // Predicated region
    $region14: #{tpu_custom_call.1} parent=1 // pred_check
      _
    $region15: #{tpu_custom_call.1} parent=1 // pred_check_branch
      %41 = sbr.rel (0) target = $region17
    $region16: #{tpu_custom_call.1} parent=1 // pred_region
      %43 = dma.done [#allocation6], 256
    $region17: #{tpu_custom_call.1} parent=1 // pred_fallthru
      _
    %v44 = vld [vmem:[#allocation2] sm:$0xff]
    %v45 = vld [vmem:[#allocation2 + $0x8] sm:$0xff]
    %v46 = vld [vmem:[#allocation5] sm:$0xff]
    %v47 = vld [vmem:[#allocation5 + $0x8] sm:$0xff]
    %vm48 = vcmask 130048
    %v50 = vsel %vm48, %v44, 0
    %v53 = vsel %vm48, %v45, 0
    %55 = vmatpush.msra.mxu0 0.0
    %56 = vmatpush.msra.mxu0 0.0
    %57 = vmatpush.msra.mxu0 0.0
    %58 = vmatpush.msra.mxu0 0.0
    %59 = vmatpush.msra.mxu0 0.0
    %60 = vmatpush.msra.mxu0 0.0
    %61 = vmatpush.msra.mxu0 0.0
    %62 = vmatpush.msra.mxu0 0.0
    %63 = vmatpush.msra.mxu0 0.0
    %64 = vmatpush.msra.mxu0 0.0
    %65 = vmatpush.msra.mxu0 0.0
    %66 = vmatpush.msra.mxu0 0.0
    %67 = vmatpush.msra.mxu0 0.0
    %68 = vmatpush.msra.mxu0 0.0
    %69 = vmatpush.msra.mxu0 %v47
    %70 = vmatpush.msra.mxu0 %v46
    %71 = vmatmul.f32.gmra.mxu0 %v50
    %v72 = vpop.f32.mrf.mxu0
    %v73 = vadd.f32 0.0, %v72
    %74 = vmatmul.f32.gmra.mxu0 %v53
    %v75 = vpop.f32.mrf.mxu0
    %v76 = vadd.f32 0.0, %v75
    %77 = vdwg.mxu0
    %78 = vst [vmem:[#allocation7] sm:$0xff] %v73
    %79 = vst [vmem:[#allocation7 + $0x8] sm:$0xff] %v76
    // Predicated region
    $region18: #{tpu_custom_call.1} parent=1 // pred_check
      _
    $region19: #{tpu_custom_call.1} parent=1 // pred_check_branch
      %81 = sbr.rel (0) target = $region21
    $region20: #{tpu_custom_call.1} parent=1 // pred_region
      %83 = vsyncadd [#allocation4], 0
      %s84 = sshll.u32 [#allocation7], 4
      %s85 = int_to_ptr.vmem [resolvable:$true] %s84
      %s86 = sshll.u32 %s2, 4
      %s87 = int_to_ptr.hbm [resolvable:$true] %s86
      %92 = dma.vmem_to_hbm [thread:$0]  %s85, 256, %s87, [#allocation4], 128, 128, 8
    $region21: #{tpu_custom_call.1} parent=1 // pred_fallthru
      _
    // Predicated region
    $region22: #{tpu_custom_call.1} parent=1 // pred_check
      _
    $region23: #{tpu_custom_call.1} parent=1 // pred_check_branch
      %94 = sbr.rel (0) target = $region25
    $region24: #{tpu_custom_call.1} parent=1 // pred_region
      %96 = dma.done [#allocation4], 256
    $region25: #{tpu_custom_call.1} parent=1 // pred_fallthru
      _
    %97 = vsyncpa [#allocation3], 1
    %98 = vsyncpa [#allocation6], 1
    %99 = vsyncpa [#allocation4], 1

</llo_original>
